<compile_context>
chip_gen: v5e
topology: v5e:2x2
jax: 0.10.0
libtpu: 0.0.40
codegen_flags: <defaults>
</compile_context>

<pallas_src>
import functools

import jax
import jax.numpy as jnp
from jax import lax
from jax.experimental import pallas as pl
from jax.experimental.pallas import tpu as pltpu

EPS = 1e-5
LANE = 128


def _round_up(x, m):
    return (x + m - 1) // m * m


def _apply_activation(h, name):
    if name == "relu":
        return jnp.maximum(h, 0.0)
    if name == "gelu":
        # PyTorch nn.GELU() default is the exact erf form.
        inv_sqrt2 = jnp.float32(0.7071067811865476)
        return 0.5 * h * (1.0 + lax.erf(h * inv_sqrt2))
    if name == "selu":
        alpha = jnp.float32(1.6732632423543772)
        scale = jnp.float32(1.0507009873554805)
        return scale * jnp.where(h > 0.0, h, alpha * (jnp.exp(h) - 1.0))
    # Unknown activation string -> the PyTorch module appends no activation layer.
    return h


def _head_kernel(x_ref, *refs, num_layers, activation):
    """refs = (w_0, b_0, w_1, b_1, ..., w_{L-1}, b_{L-1}, o_ref)."""
    o_ref = refs[-1]
    params = refs[:-1]
    # Cast to bf16 in-kernel (VPU, free) instead of a separate XLA pass in HBM.
    h = x_ref[...].astype(jnp.bfloat16)  # (TM, in_features); BN already folded.
    for li in range(num_layers):
        w = params[2 * li][...]       # bf16 (K_li, N_li), resident in VMEM
        b = params[2 * li + 1][...]   # f32  (1,  N_li)
        acc = jnp.dot(h, w, preferred_element_type=jnp.float32)  # MXU, f32 acc
        h = acc + b
        if li < num_layers - 1:
            h = _apply_activation(h, activation).astype(jnp.bfloat16)
            # nn.Dropout() is identity in eval mode.
            # TODO(synk): training-mode dropout (pltpu.prng_*) not implemented.
    o_ref[...] = h.astype(o_ref.dtype)   # lane-dense (TM, 128) store


def classifier_head_forward(x, params, *, activation="relu", row_tile=1024):
    """x: (B, ...) -> (B, out_features). Eval-mode ClassifierHead forward."""
    weights = params["weights"]    # list of bf16 (K, N) arrays (BN pre-folded)
    biases = params["biases"]      # list of f32 (1, N) arrays (BN pre-folded)
    n_out = params["out_features"]
    num_layers = len(weights)

    B = x.shape[0]
    x2 = x.reshape(B, -1)                         # nn.Flatten (no copy, no cast)
    M, K = x2.shape
    assert K == weights[0].shape[0]
    n_pad = weights[-1].shape[1]                  # lane-dense output width (128k)

    # Row-tile selection:
    #  * TM is a multiple of 8 (f32 sublane) or equal to M,
    #  * capped so the grid has >=2 steps whenever M > 8 (v7x megacore),
    #  * ragged tail handled by Pallas partial-block masking (no jnp.pad).
    if M <= 8:
        TM = M
    else:
        TM = min(_round_up(row_tile, 8), _round_up(M, 8))
        half = max(_round_up(pl.cdiv(M, 2), 8), 8)
        TM = min(TM, half)
    grid_m = pl.cdiv(M, TM)

    in_specs = [pl.BlockSpec((TM, K), lambda i: (i, 0))]
    operands = [x2]
    for w, b in zip(weights, biases):
        in_specs.append(pl.BlockSpec(w.shape, lambda i: (0, 0)))   # replicated
        in_specs.append(pl.BlockSpec(b.shape, lambda i: (0, 0)))   # replicated
        operands.append(w)
        operands.append(b)

    # Honest VMEM budget: x/out double buffers + replicated params + intermediates.
    x_item = jnp.dtype(x2.dtype).itemsize
    w_bytes = sum(int(w.size) * w.dtype.itemsize for w in weights)
    b_bytes = sum(int(b.size) * b.dtype.itemsize for b in biases)
    max_width = max(w.shape[1] for w in weights)
    vmem_need = (2 * TM * K * x_item            # x double buffer
                 + 2 * TM * n_pad * 4           # output double buffer
                 + 2 * (w_bytes + b_bytes)      # replicated params (2 bufs each)
                 + 6 * TM * max_width * 4)      # in-kernel intermediates / casts
    vmem_limit = int(min(vmem_need + (4 << 20), 64 << 20))

    kernel = functools.partial(_head_kernel, num_layers=num_layers,
                               activation=activation)
    out = pl.pallas_call(
        kernel,
        out_shape=jax.ShapeDtypeStruct((M, n_pad), jnp.float32),
        grid=(grid_m,),
        in_specs=in_specs,
        out_specs=pl.BlockSpec((TM, n_pad), lambda i: (i, 0)),
        compiler_params=pltpu.CompilerParams(
            dimension_semantics=("parallel",),     # megacore sharding on v7x
            vmem_limit_bytes=vmem_limit,
        ),
    )(*operands)
    return out[:, :n_out]


# ----------------------------------------------------------------------------
# Deterministic synthetic parameters (eval-mode BN folded into each Linear,
# final layer zero-padded to a lane-dense 128-wide output).
# ----------------------------------------------------------------------------
def init_classifier_head_params(key, in_features, out_features, hidden_layers):
    def split():
        nonlocal key
        key, sub = jax.random.split(key)
        return sub

    weights, biases = [], []
    fan_in = in_features
    dims = list(hidden_layers) + [out_features]
    for li, fan_out in enumerate(dims):
        bound = 1.0 / (fan_in ** 0.5)
        w = jax.random.uniform(split(), (fan_in, fan_out), jnp.float32, -bound, bound)
        b = jax.random.uniform(split(), (fan_out,), jnp.float32, -bound, bound)
        if li < len(hidden_layers):
            # BatchNorm1d(fan_in) in eval mode, synthetic running stats,
            # folded into this Linear: y = (x*scale + shift) @ W + b
            #                            = x @ (scale[:,None]*W) + (shift @ W + b)
            gamma = 1.0 + 0.1 * jax.random.normal(split(), (fan_in,), jnp.float32)
            beta = 0.1 * jax.random.normal(split(), (fan_in,), jnp.float32)
            mean = 0.1 * jax.random.normal(split(), (fan_in,), jnp.float32)
            var = 1.0 + 0.1 * jnp.abs(jax.random.normal(split(), (fan_in,), jnp.float32))
            scale = gamma / jnp.sqrt(var + EPS)
            shift = beta - mean * scale
            b = b + shift @ w               # uses original W
            w = scale[:, None] * w
        else:
            # Final layer: zero-pad output dim to 128 lanes -> unmasked stores.
            n_pad = _round_up(fan_out, LANE)
            w = jnp.pad(w, ((0, 0), (0, n_pad - fan_out)))
            b = jnp.pad(b, ((0, n_pad - fan_out),))
        weights.append(w.astype(jnp.bfloat16))
        biases.append(b.reshape(1, -1).astype(jnp.float32))
        fan_in = fan_out
    return {"weights": weights, "biases": biases, "out_features": out_features}


def classifier_head_reference(x, params, activation="relu"):
    """Plain-JAX reference using the same folded (bf16-stored) parameters."""
    B = x.shape[0]
    h = x.reshape(B, -1).astype(jnp.float32)
    n = len(params["weights"])
    for li, (w, b) in enumerate(zip(params["weights"], params["biases"])):
        h = h @ w.astype(jnp.float32) + b
        if li < n - 1:
            h = _apply_activation(h, activation)
    return h[:, :params["out_features"]]


# ----------------------------------------------------------------------------
if __name__ == "__main__":
    IN_C, IN_H, IN_W = 4, 16, 16
    IN_FEATURES = IN_C * IN_H * IN_W      # 1024 after nn.Flatten
    HIDDEN = [128, 64]
    NUM_CLASSES = 10
    BATCH = 2

    kp, kx = jax.random.split(jax.random.PRNGKey(0))
    params = init_classifier_head_params(kp, IN_FEATURES, NUM_CLASSES, HIDDEN)
    x = jax.random.normal(kx, (BATCH, IN_C, IN_H, IN_W), jnp.float32)  # NCHW input

    out = classifier_head_forward(x, params, activation="relu")
    out = jax.block_until_ready(out)

    assert out.shape == (BATCH, NUM_CLASSES)
    assert bool(jnp.all(jnp.isfinite(out)))
    ref = classifier_head_reference(x, params, activation="relu")
    assert bool(jnp.allclose(out, ref, atol=5e-2, rtol=5e-2)), \
        float(jnp.max(jnp.abs(out - ref)))
    print("KERNEL_OK")
</pallas_src>

<mosaic_0001>
module attributes {stable_mosaic.version = 11 : i64} {
  func.func @_head_kernel(%arg0: i32, %arg1: memref<2x1024xf32, #tpu.memory_space<vmem>>, %arg2: memref<1024x128xbf16, #tpu.memory_space<vmem>>, %arg3: memref<1x128xf32, #tpu.memory_space<vmem>>, %arg4: memref<128x64xbf16, #tpu.memory_space<vmem>>, %arg5: memref<1x64xf32, #tpu.memory_space<vmem>>, %arg6: memref<64x128xbf16, #tpu.memory_space<vmem>>, %arg7: memref<1x128xf32, #tpu.memory_space<vmem>>, %arg8: memref<2x128xf32, #tpu.memory_space<vmem>>) attributes {dimension_semantics = [#tpu.dimension_semantics<parallel>], iteration_bounds = array<i64: 1>, scalar_prefetch = 0 : i64, scratch_operands = 0 : i64, tpu.core_type = #tpu.core_type<tc>, window_params = [{transform_indices = @transform_0, window_bounds = array<i64: 2, 1024>}, {pipeline_mode = #tpu.pipeline_mode<synchronous>, transform_indices = @transform_1, window_bounds = array<i64: 1024, 128>}, {pipeline_mode = #tpu.pipeline_mode<synchronous>, transform_indices = @transform_2, window_bounds = array<i64: 1, 128>}, {pipeline_mode = #tpu.pipeline_mode<synchronous>, transform_indices = @transform_3, window_bounds = array<i64: 128, 64>}, {pipeline_mode = #tpu.pipeline_mode<synchronous>, transform_indices = @transform_4, window_bounds = array<i64: 1, 64>}, {pipeline_mode = #tpu.pipeline_mode<synchronous>, transform_indices = @transform_5, window_bounds = array<i64: 64, 128>}, {pipeline_mode = #tpu.pipeline_mode<synchronous>, transform_indices = @transform_6, window_bounds = array<i64: 1, 128>}, {transform_indices = @transform_7, window_bounds = array<i64: 2, 128>}]} {
    %c0 = arith.constant 0 : index
    %c0_0 = arith.constant 0 : index
    %0 = vector.load %arg1[%c0, %c0_0] : memref<2x1024xf32, #tpu.memory_space<vmem>>, vector<2x1024xf32>
    %1 = arith.truncf %0 : vector<2x1024xf32> to vector<2x1024xbf16>
    %c0_1 = arith.constant 0 : index
    %c0_2 = arith.constant 0 : index
    %2 = vector.load %arg2[%c0_1, %c0_2] : memref<1024x128xbf16, #tpu.memory_space<vmem>>, vector<1024x128xbf16>
    %c0_3 = arith.constant 0 : index
    %c0_4 = arith.constant 0 : index
    %3 = vector.load %arg3[%c0_3, %c0_4] : memref<1x128xf32, #tpu.memory_space<vmem>>, vector<1x128xf32>
    %cst = arith.constant dense<0.000000e+00> : vector<2x128xf32>
    %4 = tpu.matmul %1, %2, %cst {dimension_numbers = #tpu.dot_dimension_numbers<[1], [0], [0], [1], [0, 0, 1, 1], [], []>} : vector<2x1024xbf16>, vector<1024x128xbf16>, vector<2x128xf32> -> vector<2x128xf32>
    %5 = vector.broadcast %3 : vector<1x128xf32> to vector<2x128xf32>
    %6 = arith.addf %4, %5 : vector<2x128xf32>
    %cst_5 = arith.constant 0.000000e+00 : f32
    %7 = vector.broadcast %cst_5 : f32 to vector<2x128xf32>
    %8 = arith.maximumf %6, %7 : vector<2x128xf32>
    %9 = arith.truncf %8 : vector<2x128xf32> to vector<2x128xbf16>
    %c0_6 = arith.constant 0 : index
    %c0_7 = arith.constant 0 : index
    %10 = vector.load %arg4[%c0_6, %c0_7] : memref<128x64xbf16, #tpu.memory_space<vmem>>, vector<128x64xbf16>
    %c0_8 = arith.constant 0 : index
    %c0_9 = arith.constant 0 : index
    %11 = vector.load %arg5[%c0_8, %c0_9] : memref<1x64xf32, #tpu.memory_space<vmem>>, vector<1x64xf32>
    %cst_10 = arith.constant dense<0.000000e+00> : vector<2x64xf32>
    %12 = tpu.matmul %9, %10, %cst_10 {dimension_numbers = #tpu.dot_dimension_numbers<[1], [0], [0], [1], [0, 0, 1, 1], [], []>} : vector<2x128xbf16>, vector<128x64xbf16>, vector<2x64xf32> -> vector<2x64xf32>
    %13 = vector.broadcast %11 : vector<1x64xf32> to vector<2x64xf32>
    %14 = arith.addf %12, %13 : vector<2x64xf32>
    %cst_11 = arith.constant 0.000000e+00 : f32
    %15 = vector.broadcast %cst_11 : f32 to vector<2x64xf32>
    %16 = arith.maximumf %14, %15 : vector<2x64xf32>
    %17 = arith.truncf %16 : vector<2x64xf32> to vector<2x64xbf16>
    %c0_12 = arith.constant 0 : index
    %c0_13 = arith.constant 0 : index
    %18 = vector.load %arg6[%c0_12, %c0_13] : memref<64x128xbf16, #tpu.memory_space<vmem>>, vector<64x128xbf16>
    %c0_14 = arith.constant 0 : index
    %c0_15 = arith.constant 0 : index
    %19 = vector.load %arg7[%c0_14, %c0_15] : memref<1x128xf32, #tpu.memory_space<vmem>>, vector<1x128xf32>
    %cst_16 = arith.constant dense<0.000000e+00> : vector<2x128xf32>
    %20 = tpu.matmul %17, %18, %cst_16 {dimension_numbers = #tpu.dot_dimension_numbers<[1], [0], [0], [1], [0, 0, 1, 1], [], []>} : vector<2x64xbf16>, vector<64x128xbf16>, vector<2x128xf32> -> vector<2x128xf32>
    %21 = vector.broadcast %19 : vector<1x128xf32> to vector<2x128xf32>
    %22 = arith.addf %20, %21 : vector<2x128xf32>
    %c0_17 = arith.constant 0 : index
    %c0_18 = arith.constant 0 : index
    %23 = vector.load %arg8[%c0_17, %c0_18] : memref<2x128xf32, #tpu.memory_space<vmem>>, vector<2x128xf32>
    tpu.vector_store %arg8[%c0_17, %c0_18], %22 {strides = array<i32>} : memref<2x128xf32, #tpu.memory_space<vmem>>, vector<2x128xf32>,
    return
  }
  func.func @transform_0(%arg0: i32) -> (i32, i32) {
    %c0_i32 = arith.constant 0 : i32
    %c0_i32_0 = arith.constant 0 : i32
    return %arg0, %c0_i32 : i32, i32
  }
  func.func @transform_1(%arg0: i32) -> (i32, i32) {
    %c0_i32 = arith.constant 0 : i32
    %c0_i32_0 = arith.constant 0 : i32
    %c0_i32_1 = arith.constant 0 : i32
    return %c0_i32, %c0_i32_0 : i32, i32
  }
  func.func @transform_2(%arg0: i32) -> (i32, i32) {
    %c0_i32 = arith.constant 0 : i32
    %c0_i32_0 = arith.constant 0 : i32
    %c0_i32_1 = arith.constant 0 : i32
    return %c0_i32, %c0_i32_0 : i32, i32
  }
  func.func @transform_3(%arg0: i32) -> (i32, i32) {
    %c0_i32 = arith.constant 0 : i32
    %c0_i32_0 = arith.constant 0 : i32
    %c0_i32_1 = arith.constant 0 : i32
    return %c0_i32, %c0_i32_0 : i32, i32
  }
  func.func @transform_4(%arg0: i32) -> (i32, i32) {
    %c0_i32 = arith.constant 0 : i32
    %c0_i32_0 = arith.constant 0 : i32
    %c0_i32_1 = arith.constant 0 : i32
    return %c0_i32, %c0_i32_0 : i32, i32
  }
  func.func @transform_5(%arg0: i32) -> (i32, i32) {
    %c0_i32 = arith.constant 0 : i32
    %c0_i32_0 = arith.constant 0 : i32
    %c0_i32_1 = arith.constant 0 : i32
    return %c0_i32, %c0_i32_0 : i32, i32
  }
  func.func @transform_6(%arg0: i32) -> (i32, i32) {
    %c0_i32 = arith.constant 0 : i32
    %c0_i32_0 = arith.constant 0 : i32
    %c0_i32_1 = arith.constant 0 : i32
    return %c0_i32, %c0_i32_0 : i32, i32
  }
  func.func @transform_7(%arg0: i32) -> (i32, i32) {
    %c0_i32 = arith.constant 0 : i32
    %c0_i32_0 = arith.constant 0 : i32
    return %arg0, %c0_i32 : i32, i32
  }
}

</mosaic_0001>

<llo_original>
// kernel: tpu_custom_call.1
$region0: #{tpu_custom_call.1}
  #allocation0 [shape = 'u32[]', space=smem, size = 0x4, offset = 0x4, fixed_abs, tag = 'smem constant byte address 0x4 - core index']
  #allocation1 [shape = 'u32[72,128]{1,0:T(1,128)}', space=vmem, size = 0x9000, scoped, tag = 'internal scratch']
  %s0 = inlined_call_operand.vmem [shape: f32[2,1024], index: 0, kind: input, shape index: {}]
  %s1 = inlined_call_operand.hbm [shape: bf16[1024,128], index: 1, kind: input, shape index: {}]
  %s2 = inlined_call_operand.vmem [shape: f32[1,128], index: 2, kind: input, shape index: {}]
  %s3 = inlined_call_operand.vmem [shape: bf16[128,64], index: 3, kind: input, shape index: {}]
  %s4 = inlined_call_operand.vmem [shape: f32[1,64], index: 4, kind: input, shape index: {}]
  %s5 = inlined_call_operand.vmem [shape: bf16[64,128], index: 5, kind: input, shape index: {}]
  %s6 = inlined_call_operand.vmem [shape: f32[1,128], index: 6, kind: input, shape index: {}]
  %s7 = inlined_call_operand.hbm [shape: f32[2,128], index: 7, kind: output, shape index: {}]
  %s8 = sld [smem:[#allocation0]]
  $region42: #{tpu_custom_call.1} parent=0
    _
  %s10 = ssub.s32 1, %s8
  %s11 = scalar_select 0, %s10, %s8
  $region1: #{tpu_custom_call.1} parent=0
    #allocation2 [shape = 'u8[262144]{0}', space=vmem, size = 0x40000, scoped, tag = 'input window, operand 1, single buffered']
    #allocation3 [shape = 's32[1]{0}', space=sflag, size = 0x4, scoped, tag = 'scoped memory for tpu_custom_call.1']
    #allocation4 [shape = 's32[1]{0}', space=sflag, size = 0x4, scoped, tag = 'scoped memory for tpu_custom_call.1']
    #allocation5 [shape = 'u8[1024]{0}', space=vmem, size = 0x400, scoped, tag = 'output window, operand 0, single buffered']
    %12 = vsyncpa [#allocation3], 0
    %13 = vsyncpa [#allocation4], 0
    // Predicated region
    $region2: #{tpu_custom_call.1} parent=1 // pred_check
      _
    $region3: #{tpu_custom_call.1} parent=1 // pred_check_branch
      %15 = sbr.rel (0) target = $region5
    $region4: #{tpu_custom_call.1} parent=1 // pred_region
      _
    $region5: #{tpu_custom_call.1} parent=1 // pred_fallthru
      _
    // Predicated region
    $region6: #{tpu_custom_call.1} parent=1 // pred_check
      _
    $region7: #{tpu_custom_call.1} parent=1 // pred_check_branch
      %17 = sbr.rel (0) target = $region9
    $region8: #{tpu_custom_call.1} parent=1 // pred_region
      %19 = vsyncadd [#allocation3], 0
      %s20 = sshll.u32 %s1, 4
      %s21 = int_to_ptr.hbm [resolvable:$true] %s20
      %s22 = sshll.u32 [#allocation2], 4
      %s23 = int_to_ptr.vmem [resolvable:$true] %s22
      %28 = dma.hbm_to_vmem [thread:$0]  %s21, 8192, %s23, [#allocation3], 64, 64, 4
    $region9: #{tpu_custom_call.1} parent=1 // pred_fallthru
      _
    // Predicated region
    $region10: #{tpu_custom_call.1} parent=1 // pred_check
      _
    $region11: #{tpu_custom_call.1} parent=1 // pred_check_branch
      %30 = sbr.rel (0) target = $region13
    $region12: #{tpu_custom_call.1} parent=1 // pred_region
      _
    $region13: #{tpu_custom_call.1} parent=1 // pred_fallthru
      _
    // Predicated region
    $region14: #{tpu_custom_call.1} parent=1 // pred_check
      _
    $region15: #{tpu_custom_call.1} parent=1 // pred_check_branch
      %32 = sbr.rel (0) target = $region17
    $region16: #{tpu_custom_call.1} parent=1 // pred_region
      _
    $region17: #{tpu_custom_call.1} parent=1 // pred_fallthru
      _
    // Predicated region
    $region18: #{tpu_custom_call.1} parent=1 // pred_check
      _
    $region19: #{tpu_custom_call.1} parent=1 // pred_check_branch
      %34 = sbr.rel (0) target = $region21
    $region20: #{tpu_custom_call.1} parent=1 // pred_region
      _
    $region21: #{tpu_custom_call.1} parent=1 // pred_fallthru
      _
    // Predicated region
    $region22: #{tpu_custom_call.1} parent=1 // pred_check
      _
    $region23: #{tpu_custom_call.1} parent=1 // pred_check_branch
      %36 = sbr.rel (0) target = $region25
    $region24: #{tpu_custom_call.1} parent=1 // pred_region
      _
    $region25: #{tpu_custom_call.1} parent=1 // pred_fallthru
      _
    // Predicated region
    $region26: #{tpu_custom_call.1} parent=1 // pred_check
      _
    $region27: #{tpu_custom_call.1} parent=1 // pred_check_branch
      %38 = sbr.rel (0) target = $region29
    $region28: #{tpu_custom_call.1} parent=1 // pred_region
      _
    $region29: #{tpu_custom_call.1} parent=1 // pred_fallthru
      _
    // Predicated region
    $region30: #{tpu_custom_call.1} parent=1 // pred_check
      _
    $region31: #{tpu_custom_call.1} parent=1 // pred_check_branch
      %40 = sbr.rel (0) target = $region33
    $region32: #{tpu_custom_call.1} parent=1 // pred_region
      %42 = dma.done [#allocation3], 8192
    $region33: #{tpu_custom_call.1} parent=1 // pred_fallthru
      _
    %v44 = vld [vmem:[%s0] sm:$0xff]
    %v45 = vld [vmem:[%s0 + $0x8] sm:$0xff]
    %48 = vst [vmem:[#allocation1] ss:$4 sm:$0xff] %v44
    %s49 = scalar_lea.vmem [#allocation1], 32
    %50 = vst [vmem:[%s49] ss:$4 sm:$0xff] %v45
    %v51 = vld.sshfl [vmem:[#allocation1] sm:$0xff pattern:$0x73625140]
    %v52 = vld.sshfl [vmem:[#allocation1 + $0x8] sm:$0xff pattern:$0x73625140]
    %v53 = vld.sshfl [vmem:[#allocation1 + $0x10] sm:$0xff pattern:$0x73625140]
    %v54 = vld.sshfl [vmem:[#allocation1 + $0x18] sm:$0xff pattern:$0x73625140]
    %v55 = vld.sshfl [vmem:[#allocation1 + $0x20] sm:$0xff pattern:$0x73625140]
    %v56 = vld.sshfl [vmem:[#allocation1 + $0x28] sm:$0xff pattern:$0x73625140]
    %v57 = vld.sshfl [vmem:[#allocation1 + $0x30] sm:$0xff pattern:$0x73625140]
    %v58 = vld.sshfl [vmem:[#allocation1 + $0x38] sm:$0xff pattern:$0x73625140]
    %v67 = vpack.c.bf16 %v51, %v51
    %v68 = vpack.c.bf16 %v52, %v52
    %v69 = vpack.c.bf16 %v53, %v53
    %v70 = vpack.c.bf16 %v54, %v54
    %v71 = vpack.c.bf16 %v55, %v55
    %v72 = vpack.c.bf16 %v56, %v56
    %v73 = vpack.c.bf16 %v57, %v57
    %v74 = vpack.c.bf16 %v58, %v58
    %v75 = vld [vmem:[#allocation2] sm:$0xf]
    %v76 = vld [vmem:[#allocation2 + $0x4] sm:$0xf]
    %v77 = vld [vmem:[#allocation2 + $0x8] sm:$0xf]
    %v78 = vld [vmem:[#allocation2 + $0xc] sm:$0xf]
    %v79 = vld [vmem:[#allocation2 + $0x10] sm:$0xf]
    %v80 = vld [vmem:[#allocation2 + $0x14] sm:$0xf]
    %v81 = vld [vmem:[#allocation2 + $0x18] sm:$0xf]
    %v82 = vld [vmem:[#allocation2 + $0x1c] sm:$0xf]
    %v83 = vld [vmem:[#allocation2 + $0x20] sm:$0xf]
    %v84 = vld [vmem:[#allocation2 + $0x24] sm:$0xf]
    %v85 = vld [vmem:[#allocation2 + $0x28] sm:$0xf]
    %v86 = vld [vmem:[#allocation2 + $0x2c] sm:$0xf]
    %v87 = vld [vmem:[#allocation2 + $0x30] sm:$0xf]
    %v88 = vld [vmem:[#allocation2 + $0x34] sm:$0xf]
    %v89 = vld [vmem:[#allocation2 + $0x38] sm:$0xf]
    %v90 = vld [vmem:[#allocation2 + $0x3c] sm:$0xf]
    %v91 = vld [vmem:[#allocation2 + $0x40] sm:$0xf]
    %v92 = vld [vmem:[#allocation2 + $0x44] sm:$0xf]
    %v93 = vld [vmem:[#allocation2 + $0x48] sm:$0xf]
    %v94 = vld [vmem:[#allocation2 + $0x4c] sm:$0xf]
    %v95 = vld [vmem:[#allocation2 + $0x50] sm:$0xf]
    %v96 = vld [vmem:[#allocation2 + $0x54] sm:$0xf]
    %v97 = vld [vmem:[#allocation2 + $0x58] sm:$0xf]
    %v98 = vld [vmem:[#allocation2 + $0x5c] sm:$0xf]
    %v99 = vld [vmem:[#allocation2 + $0x60] sm:$0xf]
    %v100 = vld [vmem:[#allocation2 + $0x64] sm:$0xf]
    %v101 = vld [vmem:[#allocation2 + $0x68] sm:$0xf]
    %v102 = vld [vmem:[#allocation2 + $0x6c] sm:$0xf]
    %v103 = vld [vmem:[#allocation2 + $0x70] sm:$0xf]
    %v104 = vld [vmem:[#allocation2 + $0x74] sm:$0xf]
    %v105 = vld [vmem:[#allocation2 + $0x78] sm:$0xf]
    %v106 = vld [vmem:[#allocation2 + $0x7c] sm:$0xf]
    %v107 = vld [vmem:[#allocation2 + $0x80] sm:$0xf]
    %v108 = vld [vmem:[#allocation2 + $0x84] sm:$0xf]
    %v109 = vld [vmem:[#allocation2 + $0x88] sm:$0xf]
    %v110 = vld [vmem:[#allocation2 + $0x8c] sm:$0xf]
    %v111 = vld [vmem:[#allocation2 + $0x90] sm:$0xf]
    %v112 = vld [vmem:[#allocation2 + $0x94] sm:$0xf]
    %v113 = vld [vmem:[#allocation2 + $0x98] sm:$0xf]
    %v114 = vld [vmem:[#allocation2 + $0x9c] sm:$0xf]
    %v115 = vld [vmem:[#allocation2 + $0xa0] sm:$0xf]
    %v116 = vld [vmem:[#allocation2 + $0xa4] sm:$0xf]
    %v117 = vld [vmem:[#allocation2 + $0xa8] sm:$0xf]
    %v118 = vld [vmem:[#allocation2 + $0xac] sm:$0xf]
    %v119 = vld [vmem:[#allocation2 + $0xb0] sm:$0xf]
    %v120 = vld [vmem:[#allocation2 + $0xb4] sm:$0xf]
    %v121 = vld [vmem:[#allocation2 + $0xb8] sm:$0xf]
    %v122 = vld [vmem:[#allocation2 + $0xbc] sm:$0xf]
    %v123 = vld [vmem:[#allocation2 + $0xc0] sm:$0xf]
    %v124 = vld [vmem:[#allocation2 + $0xc4] sm:$0xf]
    %v125 = vld [vmem:[#allocation2 + $0xc8] sm:$0xf]
    %v126 = vld [vmem:[#allocation2 + $0xcc] sm:$0xf]
    %v127 = vld [vmem:[#allocation2 + $0xd0] sm:$0xf]
    %v128 = vld [vmem:[#allocation2 + $0xd4] sm:$0xf]
    %v129 = vld [vmem:[#allocation2 + $0xd8] sm:$0xf]
    %v130 = vld [vmem:[#allocation2 + $0xdc] sm:$0xf]
    %v131 = vld [vmem:[#allocation2 + $0xe0] sm:$0xf]
    %v132 = vld [vmem:[#allocation2 + $0xe4] sm:$0xf]
    %v133 = vld [vmem:[#allocation2 + $0xe8] sm:$0xf]
    %v134 = vld [vmem:[#allocation2 + $0xec] sm:$0xf]
    %v135 = vld [vmem:[#allocation2 + $0xf0] sm:$0xf]
    %v136 = vld [vmem:[#allocation2 + $0xf4] sm:$0xf]
    %v137 = vld [vmem:[#allocation2 + $0xf8] sm:$0xf]
    %v138 = vld [vmem:[#allocation2 + $0xfc] sm:$0xf]
    %v139 = vld [vmem:[#allocation2 + $0x100] sm:$0xf]
    %v140 = vld [vmem:[#allocation2 + $0x104] sm:$0xf]
    %v141 = vld [vmem:[#allocation2 + $0x108] sm:$0xf]
    %v142 = vld [vmem:[#allocation2 + $0x10c] sm:$0xf]
    %v143 = vld [vmem:[#allocation2 + $0x110] sm:$0xf]
    %v144 = vld [vmem:[#allocation2 + $0x114] sm:$0xf]
    %v145 = vld [vmem:[#allocation2 + $0x118] sm:$0xf]
    %v146 = vld [vmem:[#allocation2 + $0x11c] sm:$0xf]
    %v147 = vld [vmem:[#allocation2 + $0x120] sm:$0xf]
    %v148 = vld [vmem:[#allocation2 + $0x124] sm:$0xf]
    %v149 = vld [vmem:[#allocation2 + $0x128] sm:$0xf]
    %v150 = vld [vmem:[#allocation2 + $0x12c] sm:$0xf]
    %v151 = vld [vmem:[#allocation2 + $0x130] sm:$0xf]
    %v152 = vld [vmem:[#allocation2 + $0x134] sm:$0xf]
    %v153 = vld [vmem:[#allocation2 + $0x138] sm:$0xf]
    %v154 = vld [vmem:[#allocation2 + $0x13c] sm:$0xf]
    %v155 = vld [vmem:[#allocation2 + $0x140] sm:$0xf]
    %v156 = vld [vmem:[#allocation2 + $0x144] sm:$0xf]
    %v157 = vld [vmem:[#allocation2 + $0x148] sm:$0xf]
    %v158 = vld [vmem:[#allocation2 + $0x14c] sm:$0xf]
    %v159 = vld [vmem:[#allocation2 + $0x150] sm:$0xf]
    %v160 = vld [vmem:[#allocation2 + $0x154] sm:$0xf]
    %v161 = vld [vmem:[#allocation2 + $0x158] sm:$0xf]
    %v162 = vld [vmem:[#allocation2 + $0x15c] sm:$0xf]
    %v163 = vld [vmem:[#allocation2 + $0x160] sm:$0xf]
    %v164 = vld [vmem:[#allocation2 + $0x164] sm:$0xf]
    %v165 = vld [vmem:[#allocation2 + $0x168] sm:$0xf]
    %v166 = vld [vmem:[#allocation2 + $0x16c] sm:$0xf]
    %v167 = vld [vmem:[#allocation2 + $0x170] sm:$0xf]
    %v168 = vld [vmem:[#allocation2 + $0x174] sm:$0xf]
    %v169 = vld [vmem:[#allocation2 + $0x178] sm:$0xf]
    %v170 = vld [vmem:[#allocation2 + $0x17c] sm:$0xf]
    %v171 = vld [vmem:[#allocation2 + $0x180] sm:$0xf]
    %v172 = vld [vmem:[#allocation2 + $0x184] sm:$0xf]
    %v173 = vld [vmem:[#allocation2 + $0x188] sm:$0xf]
    %v174 = vld [vmem:[#allocation2 + $0x18c] sm:$0xf]
    %v175 = vld [vmem:[#allocation2 + $0x190] sm:$0xf]
    %v176 = vld [vmem:[#allocation2 + $0x194] sm:$0xf]
    %v177 = vld [vmem:[#allocation2 + $0x198] sm:$0xf]
    %v178 = vld [vmem:[#allocation2 + $0x19c] sm:$0xf]
    %v179 = vld [vmem:[#allocation2 + $0x1a0] sm:$0xf]
    %v180 = vld [vmem:[#allocation2 + $0x1a4] sm:$0xf]
    %v181 = vld [vmem:[#allocation2 + $0x1a8] sm:$0xf]
    %v182 = vld [vmem:[#allocation2 + $0x1ac] sm:$0xf]
    %v183 = vld [vmem:[#allocation2 + $0x1b0] sm:$0xf]
    %v184 = vld [vmem:[#allocation2 + $0x1b4] sm:$0xf]
    %v185 = vld [vmem:[#allocation2 + $0x1b8] sm:$0xf]
    %v186 = vld [vmem:[#allocation2 + $0x1bc] sm:$0xf]
    %v187 = vld [vmem:[#allocation2 + $0x1c0] sm:$0xf]
    %v188 = vld [vmem:[#allocation2 + $0x1c4] sm:$0xf]
    %v189 = vld [vmem:[#allocation2 + $0x1c8] sm:$0xf]
    %v190 = vld [vmem:[#allocation2 + $0x1cc] sm:$0xf]
    %v191 = vld [vmem:[#allocation2 + $0x1d0] sm:$0xf]
    %v192 = vld [vmem:[#allocation2 + $0x1d4] sm:$0xf]
    %v193 = vld [vmem:[#allocation2 + $0x1d8] sm:$0xf]
    %v194 = vld [vmem:[#allocation2 + $0x1dc] sm:$0xf]
    %v195 = vld [vmem:[#allocation2 + $0x1e0] sm:$0xf]
    %v196 = vld [vmem:[#allocation2 + $0x1e4] sm:$0xf]
    %v197 = vld [vmem:[#allocation2 + $0x1e8] sm:$0xf]
    %v198 = vld [vmem:[#allocation2 + $0x1ec] sm:$0xf]
    %v199 = vld [vmem:[#allocation2 + $0x1f0] sm:$0xf]
    %v200 = vld [vmem:[#allocation2 + $0x1f4] sm:$0xf]
    %v201 = vld [vmem:[#allocation2 + $0x1f8] sm:$0xf]
    %v202 = vld [vmem:[#allocation2 + $0x1fc] sm:$0xf]
    %v203 = vld [vmem:[%s2] sm:$0x1]
    %v205 = vperm.slane %v203, 0
    %v335 = vunpack.c.l.b16 %v75
    %v336 = vunpack.c.l.b16 %v76
    %v337 = vunpack.c.l.b16 %v77
    %v338 = vunpack.c.l.b16 %v78
    %v339 = vunpack.c.l.b16 %v79
    %v340 = vunpack.c.l.b16 %v80
    %v341 = vunpack.c.l.b16 %v81
    %v342 = vunpack.c.l.b16 %v82
    %v343 = vunpack.c.l.b16 %v83
    %v344 = vunpack.c.l.b16 %v84
    %v345 = vunpack.c.l.b16 %v85
    %v346 = vunpack.c.l.b16 %v86
    %v347 = vunpack.c.l.b16 %v87
    %v348 = vunpack.c.l.b16 %v88
    %v349 = vunpack.c.l.b16 %v89
    %v350 = vunpack.c.l.b16 %v90
    %v351 = vunpack.c.l.b16 %v91
    %v352 = vunpack.c.l.b16 %v92
    %v353 = vunpack.c.l.b16 %v93
    %v354 = vunpack.c.l.b16 %v94
    %v355 = vunpack.c.l.b16 %v95
    %v356 = vunpack.c.l.b16 %v96
    %v357 = vunpack.c.l.b16 %v97
    %v358 = vunpack.c.l.b16 %v98
    %v359 = vunpack.c.l.b16 %v99
    %v360 = vunpack.c.l.b16 %v100
    %v361 = vunpack.c.l.b16 %v101
    %v362 = vunpack.c.l.b16 %v102
    %v363 = vunpack.c.l.b16 %v103
    %v364 = vunpack.c.l.b16 %v104
    %v365 = vunpack.c.l.b16 %v105
    %v366 = vunpack.c.l.b16 %v106
    %v367 = vunpack.c.l.b16 %v107
    %v368 = vunpack.c.l.b16 %v108
    %v369 = vunpack.c.l.b16 %v109
    %v370 = vunpack.c.l.b16 %v110
    %v371 = vunpack.c.l.b16 %v111
    %v372 = vunpack.c.l.b16 %v112
    %v373 = vunpack.c.l.b16 %v113
    %v374 = vunpack.c.l.b16 %v114
    %v375 = vunpack.c.l.b16 %v115
    %v376 = vunpack.c.l.b16 %v116
    %v377 = vunpack.c.l.b16 %v117
    %v378 = vunpack.c.l.b16 %v118
    %v379 = vunpack.c.l.b16 %v119
    %v380 = vunpack.c.l.b16 %v120
    %v381 = vunpack.c.l.b16 %v121
    %v382 = vunpack.c.l.b16 %v122
    %v383 = vunpack.c.l.b16 %v123
    %v384 = vunpack.c.l.b16 %v124
    %v385 = vunpack.c.l.b16 %v125
    %v386 = vunpack.c.l.b16 %v126
    %v387 = vunpack.c.l.b16 %v127
    %v388 = vunpack.c.l.b16 %v128
    %v389 = vunpack.c.l.b16 %v129
    %v390 = vunpack.c.l.b16 %v130
    %v391 = vunpack.c.l.b16 %v131
    %v392 = vunpack.c.l.b16 %v132
    %v393 = vunpack.c.l.b16 %v133
    %v394 = vunpack.c.l.b16 %v134
    %v395 = vunpack.c.l.b16 %v135
    %v396 = vunpack.c.l.b16 %v136
    %v397 = vunpack.c.l.b16 %v137
    %v398 = vunpack.c.l.b16 %v138
    %v399 = vunpack.c.l.b16 %v139
    %v400 = vunpack.c.l.b16 %v140
    %v401 = vunpack.c.l.b16 %v141
    %v402 = vunpack.c.l.b16 %v142
    %v403 = vunpack.c.l.b16 %v143
    %v404 = vunpack.c.l.b16 %v144
    %v405 = vunpack.c.l.b16 %v145
    %v406 = vunpack.c.l.b16 %v146
    %v407 = vunpack.c.l.b16 %v147
    %v408 = vunpack.c.l.b16 %v148
    %v409 = vunpack.c.l.b16 %v149
    %v410 = vunpack.c.l.b16 %v150
    %v411 = vunpack.c.l.b16 %v151
    %v412 = vunpack.c.l.b16 %v152
    %v413 = vunpack.c.l.b16 %v153
    %v414 = vunpack.c.l.b16 %v154
    %v415 = vunpack.c.l.b16 %v155
    %v416 = vunpack.c.l.b16 %v156
    %v417 = vunpack.c.l.b16 %v157
    %v418 = vunpack.c.l.b16 %v158
    %v419 = vunpack.c.l.b16 %v159
    %v420 = vunpack.c.l.b16 %v160
    %v421 = vunpack.c.l.b16 %v161
    %v422 = vunpack.c.l.b16 %v162
    %v423 = vunpack.c.l.b16 %v163
    %v424 = vunpack.c.l.b16 %v164
    %v425 = vunpack.c.l.b16 %v165
    %v426 = vunpack.c.l.b16 %v166
    %v427 = vunpack.c.l.b16 %v167
    %v428 = vunpack.c.l.b16 %v168
    %v429 = vunpack.c.l.b16 %v169
    %v430 = vunpack.c.l.b16 %v170
    %v431 = vunpack.c.l.b16 %v171
    %v432 = vunpack.c.l.b16 %v172
    %v433 = vunpack.c.l.b16 %v173
    %v434 = vunpack.c.l.b16 %v174
    %v435 = vunpack.c.l.b16 %v175
    %v436 = vunpack.c.l.b16 %v176
    %v437 = vunpack.c.l.b16 %v177
    %v438 = vunpack.c.l.b16 %v178
    %v439 = vunpack.c.l.b16 %v179
    %v440 = vunpack.c.l.b16 %v180
    %v441 = vunpack.c.l.b16 %v181
    %v442 = vunpack.c.l.b16 %v182
    %v443 = vunpack.c.l.b16 %v183
    %v444 = vunpack.c.l.b16 %v184
    %v445 = vunpack.c.l.b16 %v185
    %v446 = vunpack.c.l.b16 %v186
    %v447 = vunpack.c.l.b16 %v187
    %v448 = vunpack.c.l.b16 %v188
    %v449 = vunpack.c.l.b16 %v189
    %v450 = vunpack.c.l.b16 %v190
    %v451 = vunpack.c.l.b16 %v191
    %v452 = vunpack.c.l.b16 %v192
    %v453 = vunpack.c.l.b16 %v193
    %v454 = vunpack.c.l.b16 %v194
    %v455 = vunpack.c.l.b16 %v195
    %v456 = vunpack.c.l.b16 %v196
    %v457 = vunpack.c.l.b16 %v197
    %v458 = vunpack.c.l.b16 %v198
    %v459 = vunpack.c.l.b16 %v199
    %v460 = vunpack.c.l.b16 %v200
    %v461 = vunpack.c.l.b16 %v201
    %v462 = vunpack.c.l.b16 %v202
    %v463 = vpack.c.b16 %v336, %v335
    %v464 = vpack.c.b16 %v338, %v337
    %v465 = vpack.c.b16 %v340, %v339
    %v466 = vpack.c.b16 %v342, %v341
    %v467 = vpack.c.b16 %v344, %v343
    %v468 = vpack.c.b16 %v346, %v345
    %v469 = vpack.c.b16 %v348, %v347
    %v470 = vpack.c.b16 %v350, %v349
    %v471 = vpack.c.b16 %v352, %v351
    %v472 = vpack.c.b16 %v354, %v353
    %v473 = vpack.c.b16 %v356, %v355
    %v474 = vpack.c.b16 %v358, %v357
    %v475 = vpack.c.b16 %v360, %v359
    %v476 = vpack.c.b16 %v362, %v361
    %v477 = vpack.c.b16 %v364, %v363
    %v478 = vpack.c.b16 %v366, %v365
    %v479 = vpack.c.b16 %v368, %v367
    %v480 = vpack.c.b16 %v370, %v369
    %v481 = vpack.c.b16 %v372, %v371
    %v482 = vpack.c.b16 %v374, %v373
    %v483 = vpack.c.b16 %v376, %v375
    %v484 = vpack.c.b16 %v378, %v377
    %v485 = vpack.c.b16 %v380, %v379
    %v486 = vpack.c.b16 %v382, %v381
    %v487 = vpack.c.b16 %v384, %v383
    %v488 = vpack.c.b16 %v386, %v385
    %v489 = vpack.c.b16 %v388, %v387
    %v490 = vpack.c.b16 %v390, %v389
    %v491 = vpack.c.b16 %v392, %v391
    %v492 = vpack.c.b16 %v394, %v393
    %v493 = vpack.c.b16 %v396, %v395
    %v494 = vpack.c.b16 %v398, %v397
    %v495 = vpack.c.b16 %v400, %v399
    %v496 = vpack.c.b16 %v402, %v401
    %v497 = vpack.c.b16 %v404, %v403
    %v498 = vpack.c.b16 %v406, %v405
    %v499 = vpack.c.b16 %v408, %v407
    %v500 = vpack.c.b16 %v410, %v409
    %v501 = vpack.c.b16 %v412, %v411
    %v502 = vpack.c.b16 %v414, %v413
    %v503 = vpack.c.b16 %v416, %v415
    %v504 = vpack.c.b16 %v418, %v417
    %v505 = vpack.c.b16 %v420, %v419
    %v506 = vpack.c.b16 %v422, %v421
    %v507 = vpack.c.b16 %v424, %v423
    %v508 = vpack.c.b16 %v426, %v425
    %v509 = vpack.c.b16 %v428, %v427
    %v510 = vpack.c.b16 %v430, %v429
    %v511 = vpack.c.b16 %v432, %v431
    %v512 = vpack.c.b16 %v434, %v433
    %v513 = vpack.c.b16 %v436, %v435
    %v514 = vpack.c.b16 %v438, %v437
    %v515 = vpack.c.b16 %v440, %v439
    %v516 = vpack.c.b16 %v442, %v441
    %v517 = vpack.c.b16 %v444, %v443
    %v518 = vpack.c.b16 %v446, %v445
    %v519 = vpack.c.b16 %v448, %v447
    %v520 = vpack.c.b16 %v450, %v449
    %v521 = vpack.c.b16 %v452, %v451
    %v522 = vpack.c.b16 %v454, %v453
    %v523 = vpack.c.b16 %v456, %v455
    %v524 = vpack.c.b16 %v458, %v457
    %v525 = vpack.c.b16 %v460, %v459
    %v526 = vpack.c.b16 %v462, %v461
    %591 = vmatpush.bf16.msra.mxu0 %v470
    %592 = vmatpush.bf16.msra.mxu0 %v469
    %593 = vmatpush.bf16.msra.mxu0 %v468
    %594 = vmatpush.bf16.msra.mxu0 %v467
    %595 = vmatpush.bf16.msra.mxu0 %v466
    %596 = vmatpush.bf16.msra.mxu0 %v465
    %597 = vmatpush.bf16.msra.mxu0 %v464
    %598 = vmatpush.bf16.msra.mxu0 %v463
    %599 = vmatmul.bf16.gmra.mxu0 %v67
    %v600 = vpop.f32.mrf.mxu0
    %v601 = vadd.f32 %v205, %v600
    %v602 = vpop.f32.mrf.mxu0
    %603 = vdwg.mxu0
    %604 = vmatpush.bf16.msra.mxu0 %v478
    %605 = vmatpush.bf16.msra.mxu0 %v477
    %606 = vmatpush.bf16.msra.mxu0 %v476
    %607 = vmatpush.bf16.msra.mxu0 %v475
    %608 = vmatpush.bf16.msra.mxu0 %v474
    %609 = vmatpush.bf16.msra.mxu0 %v473
    %610 = vmatpush.bf16.msra.mxu0 %v472
    %611 = vmatpush.bf16.msra.mxu0 %v471
    %612 = vmatmul.bf16.gmra.mxu0 %v68
    %v613 = vpop.f32.mrf.mxu0
    %v614 = vadd.f32 %v601, %v613
    %v615 = vpop.f32.mrf.mxu0
    %616 = vdwg.mxu0
    %617 = vmatpush.bf16.msra.mxu0 %v486
    %618 = vmatpush.bf16.msra.mxu0 %v485
    %619 = vmatpush.bf16.msra.mxu0 %v484
    %620 = vmatpush.bf16.msra.mxu0 %v483
    %621 = vmatpush.bf16.msra.mxu0 %v482
    %622 = vmatpush.bf16.msra.mxu0 %v481
    %623 = vmatpush.bf16.msra.mxu0 %v480
    %624 = vmatpush.bf16.msra.mxu0 %v479
    %625 = vmatmul.bf16.gmra.mxu0 %v69
    %v626 = vpop.f32.mrf.mxu0
    %v627 = vadd.f32 %v614, %v626
    %v628 = vpop.f32.mrf.mxu0
    %629 = vdwg.mxu0
    %630 = vmatpush.bf16.msra.mxu0 %v494
    %631 = vmatpush.bf16.msra.mxu0 %v493
    %632 = vmatpush.bf16.msra.mxu0 %v492
    %633 = vmatpush.bf16.msra.mxu0 %v491
    %634 = vmatpush.bf16.msra.mxu0 %v490
    %635 = vmatpush.bf16.msra.mxu0 %v489
    %636 = vmatpush.bf16.msra.mxu0 %v488
    %637 = vmatpush.bf16.msra.mxu0 %v487
    %638 = vmatmul.bf16.gmra.mxu0 %v70
    %v639 = vpop.f32.mrf.mxu0
    %v640 = vadd.f32 %v627, %v639
    %v641 = vpop.f32.mrf.mxu0
    %642 = vdwg.mxu0
    %643 = vmatpush.bf16.msra.mxu0 %v502
    %644 = vmatpush.bf16.msra.mxu0 %v501
    %645 = vmatpush.bf16.msra.mxu0 %v500
    %646 = vmatpush.bf16.msra.mxu0 %v499
    %647 = vmatpush.bf16.msra.mxu0 %v498
    %648 = vmatpush.bf16.msra.mxu0 %v497
    %649 = vmatpush.bf16.msra.mxu0 %v496
    %650 = vmatpush.bf16.msra.mxu0 %v495
    %651 = vmatmul.bf16.gmra.mxu0 %v71
    %v652 = vpop.f32.mrf.mxu0
    %v653 = vadd.f32 %v640, %v652
    %v654 = vpop.f32.mrf.mxu0
    %655 = vdwg.mxu0
    %656 = vmatpush.bf16.msra.mxu0 %v510
    %657 = vmatpush.bf16.msra.mxu0 %v509
    %658 = vmatpush.bf16.msra.mxu0 %v508
    %659 = vmatpush.bf16.msra.mxu0 %v507
    %660 = vmatpush.bf16.msra.mxu0 %v506
    %661 = vmatpush.bf16.msra.mxu0 %v505
    %662 = vmatpush.bf16.msra.mxu0 %v504
    %663 = vmatpush.bf16.msra.mxu0 %v503
    %664 = vmatmul.bf16.gmra.mxu0 %v72
    %v665 = vpop.f32.mrf.mxu0
    %v666 = vadd.f32 %v653, %v665
    %v667 = vpop.f32.mrf.mxu0
    %668 = vdwg.mxu0
    %669 = vmatpush.bf16.msra.mxu0 %v518
    %670 = vmatpush.bf16.msra.mxu0 %v517
    %671 = vmatpush.bf16.msra.mxu0 %v516
    %672 = vmatpush.bf16.msra.mxu0 %v515
    %673 = vmatpush.bf16.msra.mxu0 %v514
    %674 = vmatpush.bf16.msra.mxu0 %v513
    %675 = vmatpush.bf16.msra.mxu0 %v512
    %676 = vmatpush.bf16.msra.mxu0 %v511
    %677 = vmatmul.bf16.gmra.mxu0 %v73
    %v678 = vpop.f32.mrf.mxu0
    %v679 = vadd.f32 %v666, %v678
    %v680 = vpop.f32.mrf.mxu0
    %681 = vdwg.mxu0
    %682 = vmatpush.bf16.msra.mxu0 %v526
    %683 = vmatpush.bf16.msra.mxu0 %v525
    %684 = vmatpush.bf16.msra.mxu0 %v524
    %685 = vmatpush.bf16.msra.mxu0 %v523
    %686 = vmatpush.bf16.msra.mxu0 %v522
    %687 = vmatpush.bf16.msra.mxu0 %v521
    %688 = vmatpush.bf16.msra.mxu0 %v520
    %689 = vmatpush.bf16.msra.mxu0 %v519
    %690 = vmatmul.bf16.gmra.mxu0 %v74
    %v691 = vpop.f32.mrf.mxu0
    %v692 = vadd.f32 %v679, %v691
    %v693 = vpop.f32.mrf.mxu0
    %694 = vdwg.mxu0
    %v695 = vmax.f32 %v692, 0.0
    %v696 = vpack.c.bf16 %v695, %v695
    %v697 = vld [vmem:[%s3] sm:$0xf]
    %v698 = vld [vmem:[%s3 + $0x4] sm:$0xf]
    %v699 = vld [vmem:[%s3 + $0x8] sm:$0xf]
    %v700 = vld [vmem:[%s3 + $0xc] sm:$0xf]
    %v701 = vld [vmem:[%s3 + $0x10] sm:$0xf]
    %v702 = vld [vmem:[%s3 + $0x14] sm:$0xf]
    %v703 = vld [vmem:[%s3 + $0x18] sm:$0xf]
    %v704 = vld [vmem:[%s3 + $0x1c] sm:$0xf]
    %v705 = vld [vmem:[%s3 + $0x20] sm:$0xf]
    %v706 = vld [vmem:[%s3 + $0x24] sm:$0xf]
    %v707 = vld [vmem:[%s3 + $0x28] sm:$0xf]
    %v708 = vld [vmem:[%s3 + $0x2c] sm:$0xf]
    %v709 = vld [vmem:[%s3 + $0x30] sm:$0xf]
    %v710 = vld [vmem:[%s3 + $0x34] sm:$0xf]
    %v711 = vld [vmem:[%s3 + $0x38] sm:$0xf]
    %v712 = vld [vmem:[%s3 + $0x3c] sm:$0xf]
    %v713 = vld [vmem:[%s4] sm:$0x1]
    %v715 = vperm.slane %v713, 0
    %v733 = vunpack.c.l.b16 %v697
    %v734 = vunpack.c.l.b16 %v698
    %v735 = vunpack.c.l.b16 %v699
    %v736 = vunpack.c.l.b16 %v700
    %v737 = vunpack.c.l.b16 %v701
    %v738 = vunpack.c.l.b16 %v702
    %v739 = vunpack.c.l.b16 %v703
    %v740 = vunpack.c.l.b16 %v704
    %v741 = vunpack.c.l.b16 %v705
    %v742 = vunpack.c.l.b16 %v706
    %v743 = vunpack.c.l.b16 %v707
    %v744 = vunpack.c.l.b16 %v708
    %v745 = vunpack.c.l.b16 %v709
    %v746 = vunpack.c.l.b16 %v710
    %v747 = vunpack.c.l.b16 %v711
    %v748 = vunpack.c.l.b16 %v712
    %v749 = vpack.c.b16 %v734, %v733
    %v750 = vpack.c.b16 %v736, %v735
    %v751 = vpack.c.b16 %v738, %v737
    %v752 = vpack.c.b16 %v740, %v739
    %v753 = vpack.c.b16 %v742, %v741
    %v754 = vpack.c.b16 %v744, %v743
    %v755 = vpack.c.b16 %v746, %v745
    %v756 = vpack.c.b16 %v748, %v747
    %765 = vmatpush.bf16.msra.mxu0 %v756
    %766 = vmatpush.bf16.msra.mxu0 %v755
    %767 = vmatpush.bf16.msra.mxu0 %v754
    %768 = vmatpush.bf16.msra.mxu0 %v753
    %769 = vmatpush.bf16.msra.mxu0 %v752
    %770 = vmatpush.bf16.msra.mxu0 %v751
    %771 = vmatpush.bf16.msra.mxu0 %v750
    %772 = vmatpush.bf16.msra.mxu0 %v749
    %773 = vmatmul.bf16.gmra.mxu0 %v696
    %v774 = vpop.f32.mrf.mxu0
    %v775 = vadd.f32 %v715, %v774
    %v776 = vpop.f32.mrf.mxu0
    %777 = vdwg.mxu0
    %v778 = vmax.f32 %v775, 0.0
    %v779 = vpack.c.bf16 %v778, %v778
    %v780 = vld [vmem:[%s5] sm:$0xf]
    %v781 = vld [vmem:[%s5 + $0x4] sm:$0xf]
    %v782 = vld [vmem:[%s5 + $0x8] sm:$0xf]
    %v783 = vld [vmem:[%s5 + $0xc] sm:$0xf]
    %v784 = vld [vmem:[%s5 + $0x10] sm:$0xf]
    %v785 = vld [vmem:[%s5 + $0x14] sm:$0xf]
    %v786 = vld [vmem:[%s5 + $0x18] sm:$0xf]
    %v787 = vld [vmem:[%s5 + $0x1c] sm:$0xf]
    %v788 = vld [vmem:[%s6] sm:$0x1]
    %v790 = vperm.slane %v788, 0
    %v800 = vunpack.c.l.b16 %v780
    %v801 = vunpack.c.l.b16 %v781
    %v802 = vunpack.c.l.b16 %v782
    %v803 = vunpack.c.l.b16 %v783
    %v804 = vunpack.c.l.b16 %v784
    %v805 = vunpack.c.l.b16 %v785
    %v806 = vunpack.c.l.b16 %v786
    %v807 = vunpack.c.l.b16 %v787
    %v808 = vpack.c.b16 %v801, %v800
    %v809 = vpack.c.b16 %v803, %v802
    %v810 = vpack.c.b16 %v805, %v804
    %v811 = vpack.c.b16 %v807, %v806
    %vm816 = vcmask 523264
    %v818 = vsel %vm816, %v779, 0
    %820 = vmatpush.bf16.msra.mxu0 0
    %821 = vmatpush.bf16.msra.mxu0 0
    %822 = vmatpush.bf16.msra.mxu0 0
    %823 = vmatpush.bf16.msra.mxu0 0
    %824 = vmatpush.bf16.msra.mxu0 %v811
    %825 = vmatpush.bf16.msra.mxu0 %v810
    %826 = vmatpush.bf16.msra.mxu0 %v809
    %827 = vmatpush.bf16.msra.mxu0 %v808
    %828 = vmatmul.bf16.gmra.mxu0 %v818
    %v829 = vpop.f32.mrf.mxu0
    %v830 = vadd.f32 %v790, %v829
    %v831 = vpop.f32.mrf.mxu0
    %832 = vdwg.mxu0
    %833 = vst [vmem:[#allocation5] sm:$0x3] %v830
    // Predicated region
    $region34: #{tpu_custom_call.1} parent=1 // pred_check
      _
    $region35: #{tpu_custom_call.1} parent=1 // pred_check_branch
      %835 = sbr.rel (0) target = $region37
    $region36: #{tpu_custom_call.1} parent=1 // pred_region
      %837 = vsyncadd [#allocation4], 0
      %s839 = sshll.u32 [#allocation5], 4
      %s840 = int_to_ptr.vmem [resolvable:$true] %s839
      %s841 = sshll.u32 %s7, 4
      %s842 = int_to_ptr.hbm [resolvable:$true] %s841
      %844 = dma.vmem_to_hbm [thread:$0]  %s840, 32, %s842, [#allocation4]
    $region37: #{tpu_custom_call.1} parent=1 // pred_fallthru
      _
    // Predicated region
    $region38: #{tpu_custom_call.1} parent=1 // pred_check
      _
    $region39: #{tpu_custom_call.1} parent=1 // pred_check_branch
      %846 = sbr.rel (0) target = $region41
    $region40: #{tpu_custom_call.1} parent=1 // pred_region
      %848 = dma.done [#allocation4], 32
    $region41: #{tpu_custom_call.1} parent=1 // pred_fallthru
      _
    %849 = vsyncpa [#allocation3], 1
    %850 = vsyncpa [#allocation4], 1

</llo_original>
